<compile_context>
chip_gen: v7x
topology: tpu7x:2x2x1
jax: 0.10.0
libtpu: 0.0.40
codegen_flags: <defaults>
</compile_context>

<pallas_src>
import jax
import jax.numpy as jnp
from jax.experimental import pallas as pl
from jax.experimental.pallas import tpu as pltpu


def simple_nn_kernel(x_ref, w1_ref, b1_ref, w2_ref, b2_ref, w3_ref, b3_ref,
                     ot_ref):
    x = x_ref[...]                                   # (TB, 10) f32, batch-major

    # Layer 1: Linear(10 -> 20) + ReLU.  Contract on x's feature axis so the
    # batch lands on the lane axis of the result -> (20, TB), f32 MXU accumulate.
    h1 = jax.lax.dot_general(
        w1_ref[...], x, (((1,), (1,)), ((), ())),
        preferred_element_type=jnp.float32) + b1_ref[...]
    h1 = jnp.maximum(h1, 0.0)

    # Layer 2: Linear(20 -> 15) + ReLU          -> (15, TB)
    h2 = jnp.dot(w2_ref[...], h1,
                 preferred_element_type=jnp.float32) + b2_ref[...]
    h2 = jnp.maximum(h2, 0.0)

    # Layer 3: Linear(15 -> 5) + Sigmoid        -> (5, TB)
    h3 = jnp.dot(w3_ref[...], h2,
                 preferred_element_type=jnp.float32) + b3_ref[...]
    # exp runs on the otherwise-idle EUP slot; overflow of exp(-x) to inf
    # still yields the correct 0 for very negative x.
    ot_ref[...] = 1.0 / (1.0 + jnp.exp(-h3))


def simple_nn_forward(x, params, tile_b=8192):
    """x: (B, 10) float32 batch-major (PyTorch convention). Returns (B, 5) f32.

    tile_b: batch tile on the lane axis (rounded down to a multiple of 128 and
    capped at the 128-aligned batch, so small batches are a single grid step).
    """
    w1, b1, w2, b2, w3, b3 = params
    B, in_f = x.shape
    out_f = w3.shape[0]

    # Lane-align the batch and pick the tile size.
    tile_b = max(128, (int(tile_b) // 128) * 128)
    b_aligned = pl.cdiv(B, 128) * 128
    tile_b = min(tile_b, b_aligned)
    b_pad = pl.cdiv(b_aligned, tile_b) * tile_b

    # Pad only when the batch is ragged w.r.t. the tile (extra pass only then).
    if b_pad != B:
        x = jnp.pad(x, ((0, b_pad - B), (0, 0)))

    grid = (b_pad // tile_b,)

    # Weights/biases: constant block index -> fetched once, VMEM-resident.
    resident = lambda a: pl.BlockSpec(a.shape, lambda i: (0, 0))

    out_t = pl.pallas_call(
        simple_nn_kernel,
        out_shape=jax.ShapeDtypeStruct((out_f, b_pad), jnp.float32),
        grid=grid,
        in_specs=[
            pl.BlockSpec((tile_b, in_f), lambda i: (i, 0)),   # batch-major x tile
            resident(w1), resident(b1),
            resident(w2), resident(b2),
            resident(w3), resident(b3),
        ],
        out_specs=pl.BlockSpec((out_f, tile_b), lambda i: (0, i)),
        compiler_params=pltpu.CompilerParams(
            dimension_semantics=("parallel",),          # v7x: shard over 2 TCs
            vmem_limit_bytes=64 * 1024 * 1024),
    )(x, w1, b1, w2, b2, w3, b3)

    # Single unavoidable layout pass: feature-major -> (B, 5) batch-major.
    return out_t.T[:B]


def init_params(key):
    """Deterministic init mimicking nn.Linear's uniform(-1/sqrt(fan_in), ...).

    Weights are (out_features, in_features) float32 (PyTorch layout);
    biases are (out_features, 1) float32."""
    dims = [(10, 20), (20, 15), (15, 5)]
    params = []
    for fan_in, fan_out in dims:
        key, kw, kb = jax.random.split(key, 3)
        bound = 1.0 / (fan_in ** 0.5)
        w = jax.random.uniform(kw, (fan_out, fan_in), jnp.float32,
                               minval=-bound, maxval=bound)
        b = jax.random.uniform(kb, (fan_out, 1), jnp.float32,
                               minval=-bound, maxval=bound)
        params += [w, b]
    return tuple(params)


def reference_forward(x, params):
    """Pure-JAX f32 reference mirroring the PyTorch SimpleNN forward."""
    w1, b1, w2, b2, w3, b3 = params
    h = jnp.maximum(x @ w1.T + b1.T, 0.0)
    h = jnp.maximum(h @ w2.T + b2.T, 0.0)
    return jax.nn.sigmoid(h @ w3.T + b3.T)


if __name__ == "__main__":
    root = jax.random.PRNGKey(0)
    kp, kx1, kx2 = jax.random.split(root, 3)
    params = init_params(kp)

    # Small correctness-scale run: default tile_b caps at the 128-aligned
    # batch (-> single grid step); also exercises the ragged-batch padding.
    B = 300
    x = jax.random.normal(kx1, (B, 10), jnp.float32)
    out = jax.block_until_ready(simple_nn_forward(x, params))
    ref = reference_forward(x, params)
    assert out.shape == (B, 5), out.shape
    assert jnp.allclose(out, ref, atol=1e-5, rtol=1e-5), \
        "mismatch vs reference (single tile)"

    # Exercise the multi-step pipelined grid path (tile override is for test
    # coverage only; the production default stays at 8192).
    B2 = 1024
    x2 = jax.random.normal(kx2, (B2, 10), jnp.float32)
    out2 = jax.block_until_ready(simple_nn_forward(x2, params, tile_b=256))
    ref2 = reference_forward(x2, params)
    assert out2.shape == (B2, 5), out2.shape
    assert jnp.allclose(out2, ref2, atol=1e-5, rtol=1e-5), \
        "mismatch vs reference (multi tile)"

    print("KERNEL_OK")
</pallas_src>

<mosaic_0001>
module attributes {stable_mosaic.version = 11 : i64} {
  func.func @simple_nn_kernel(%arg0: i32, %arg1: memref<384x10xf32, #tpu.memory_space<vmem>>, %arg2: memref<20x10xf32, #tpu.memory_space<vmem>>, %arg3: memref<20x1xf32, #tpu.memory_space<vmem>>, %arg4: memref<15x20xf32, #tpu.memory_space<vmem>>, %arg5: memref<15x1xf32, #tpu.memory_space<vmem>>, %arg6: memref<5x15xf32, #tpu.memory_space<vmem>>, %arg7: memref<5x1xf32, #tpu.memory_space<vmem>>, %arg8: memref<5x384xf32, #tpu.memory_space<vmem>>) attributes {dimension_semantics = [#tpu.dimension_semantics<parallel>], iteration_bounds = array<i64: 1>, scalar_prefetch = 0 : i64, scratch_operands = 0 : i64, tpu.core_type = #tpu.core_type<tc>, window_params = [{transform_indices = @transform_0, window_bounds = array<i64: 384, 10>}, {pipeline_mode = #tpu.pipeline_mode<synchronous>, transform_indices = @transform_1, window_bounds = array<i64: 20, 10>}, {pipeline_mode = #tpu.pipeline_mode<synchronous>, transform_indices = @transform_2, window_bounds = array<i64: 20, 1>}, {pipeline_mode = #tpu.pipeline_mode<synchronous>, transform_indices = @transform_3, window_bounds = array<i64: 15, 20>}, {pipeline_mode = #tpu.pipeline_mode<synchronous>, transform_indices = @transform_4, window_bounds = array<i64: 15, 1>}, {pipeline_mode = #tpu.pipeline_mode<synchronous>, transform_indices = @transform_5, window_bounds = array<i64: 5, 15>}, {pipeline_mode = #tpu.pipeline_mode<synchronous>, transform_indices = @transform_6, window_bounds = array<i64: 5, 1>}, {transform_indices = @transform_7, window_bounds = array<i64: 5, 384>}]} {
    %c0 = arith.constant 0 : index
    %c0_0 = arith.constant 0 : index
    %0 = vector.load %arg1[%c0, %c0_0] : memref<384x10xf32, #tpu.memory_space<vmem>>, vector<384x10xf32>
    %c0_1 = arith.constant 0 : index
    %c0_2 = arith.constant 0 : index
    %1 = vector.load %arg2[%c0_1, %c0_2] : memref<20x10xf32, #tpu.memory_space<vmem>>, vector<20x10xf32>
    %cst = arith.constant dense<0.000000e+00> : vector<20x384xf32>
    %2 = tpu.matmul %1, %0, %cst {dimension_numbers = #tpu.dot_dimension_numbers<[1], [1], [0], [0], [0, 0, 1, 0], [], []>} : vector<20x10xf32>, vector<384x10xf32>, vector<20x384xf32> -> vector<20x384xf32>
    %c0_3 = arith.constant 0 : index
    %c0_4 = arith.constant 0 : index
    %3 = vector.load %arg3[%c0_3, %c0_4] : memref<20x1xf32, #tpu.memory_space<vmem>>, vector<20x1xf32>
    %4 = vector.broadcast %3 : vector<20x1xf32> to vector<20x384xf32>
    %5 = arith.addf %2, %4 : vector<20x384xf32>
    %cst_5 = arith.constant 0.000000e+00 : f32
    %6 = vector.broadcast %cst_5 : f32 to vector<20x384xf32>
    %7 = arith.maximumf %5, %6 : vector<20x384xf32>
    %c0_6 = arith.constant 0 : index
    %c0_7 = arith.constant 0 : index
    %8 = vector.load %arg4[%c0_6, %c0_7] : memref<15x20xf32, #tpu.memory_space<vmem>>, vector<15x20xf32>
    %cst_8 = arith.constant dense<0.000000e+00> : vector<15x384xf32>
    %9 = tpu.matmul %8, %7, %cst_8 {dimension_numbers = #tpu.dot_dimension_numbers<[1], [0], [0], [1], [0, 0, 1, 1], [], []>} : vector<15x20xf32>, vector<20x384xf32>, vector<15x384xf32> -> vector<15x384xf32>
    %c0_9 = arith.constant 0 : index
    %c0_10 = arith.constant 0 : index
    %10 = vector.load %arg5[%c0_9, %c0_10] : memref<15x1xf32, #tpu.memory_space<vmem>>, vector<15x1xf32>
    %11 = vector.broadcast %10 : vector<15x1xf32> to vector<15x384xf32>
    %12 = arith.addf %9, %11 : vector<15x384xf32>
    %cst_11 = arith.constant 0.000000e+00 : f32
    %13 = vector.broadcast %cst_11 : f32 to vector<15x384xf32>
    %14 = arith.maximumf %12, %13 : vector<15x384xf32>
    %c0_12 = arith.constant 0 : index
    %c0_13 = arith.constant 0 : index
    %15 = vector.load %arg6[%c0_12, %c0_13] : memref<5x15xf32, #tpu.memory_space<vmem>>, vector<5x15xf32>
    %cst_14 = arith.constant dense<0.000000e+00> : vector<5x384xf32>
    %16 = tpu.matmul %15, %14, %cst_14 {dimension_numbers = #tpu.dot_dimension_numbers<[1], [0], [0], [1], [0, 0, 1, 1], [], []>} : vector<5x15xf32>, vector<15x384xf32>, vector<5x384xf32> -> vector<5x384xf32>
    %c0_15 = arith.constant 0 : index
    %c0_16 = arith.constant 0 : index
    %17 = vector.load %arg7[%c0_15, %c0_16] : memref<5x1xf32, #tpu.memory_space<vmem>>, vector<5x1xf32>
    %18 = vector.broadcast %17 : vector<5x1xf32> to vector<5x384xf32>
    %19 = arith.addf %16, %18 : vector<5x384xf32>
    %cst_17 = arith.constant 0.000000e+00 : f32
    %20 = vector.broadcast %cst_17 : f32 to vector<5x384xf32>
    %21 = arith.subf %20, %19 : vector<5x384xf32>
    %22 = math.exp %21 : vector<5x384xf32>
    %cst_18 = arith.constant 1.000000e+00 : f32
    %23 = vector.broadcast %cst_18 : f32 to vector<5x384xf32>
    %24 = arith.addf %23, %22 : vector<5x384xf32>
    %cst_19 = arith.constant 1.000000e+00 : f32
    %25 = vector.broadcast %cst_19 : f32 to vector<5x384xf32>
    %26 = arith.divf %25, %24 : vector<5x384xf32>
    %c0_20 = arith.constant 0 : index
    %c0_21 = arith.constant 0 : index
    %27 = vector.load %arg8[%c0_20, %c0_21] : memref<5x384xf32, #tpu.memory_space<vmem>>, vector<5x384xf32>
    tpu.vector_store %arg8[%c0_20, %c0_21], %26 {strides = array<i32>} : memref<5x384xf32, #tpu.memory_space<vmem>>, vector<5x384xf32>,
    return
  }
  func.func @transform_0(%arg0: i32) -> (i32, i32) {
    %c0_i32 = arith.constant 0 : i32
    %c0_i32_0 = arith.constant 0 : i32
    return %arg0, %c0_i32 : i32, i32
  }
  func.func @transform_1(%arg0: i32) -> (i32, i32) {
    %c0_i32 = arith.constant 0 : i32
    %c0_i32_0 = arith.constant 0 : i32
    %c0_i32_1 = arith.constant 0 : i32
    return %c0_i32, %c0_i32_0 : i32, i32
  }
  func.func @transform_2(%arg0: i32) -> (i32, i32) {
    %c0_i32 = arith.constant 0 : i32
    %c0_i32_0 = arith.constant 0 : i32
    %c0_i32_1 = arith.constant 0 : i32
    return %c0_i32, %c0_i32_0 : i32, i32
  }
  func.func @transform_3(%arg0: i32) -> (i32, i32) {
    %c0_i32 = arith.constant 0 : i32
    %c0_i32_0 = arith.constant 0 : i32
    %c0_i32_1 = arith.constant 0 : i32
    return %c0_i32, %c0_i32_0 : i32, i32
  }
  func.func @transform_4(%arg0: i32) -> (i32, i32) {
    %c0_i32 = arith.constant 0 : i32
    %c0_i32_0 = arith.constant 0 : i32
    %c0_i32_1 = arith.constant 0 : i32
    return %c0_i32, %c0_i32_0 : i32, i32
  }
  func.func @transform_5(%arg0: i32) -> (i32, i32) {
    %c0_i32 = arith.constant 0 : i32
    %c0_i32_0 = arith.constant 0 : i32
    %c0_i32_1 = arith.constant 0 : i32
    return %c0_i32, %c0_i32_0 : i32, i32
  }
  func.func @transform_6(%arg0: i32) -> (i32, i32) {
    %c0_i32 = arith.constant 0 : i32
    %c0_i32_0 = arith.constant 0 : i32
    %c0_i32_1 = arith.constant 0 : i32
    return %c0_i32, %c0_i32_0 : i32, i32
  }
  func.func @transform_7(%arg0: i32) -> (i32, i32) {
    %c0_i32 = arith.constant 0 : i32
    %c0_i32_0 = arith.constant 0 : i32
    return %c0_i32, %arg0 : i32, i32
  }
}

</mosaic_0001>

<llo_original>
// kernel: tpu_custom_call.1
$region0: #{tpu_custom_call.1}
  #allocation0 [shape = 'u32[]', space=smem, size = 0x4, offset = 0x4, fixed_abs, tag = 'smem constant byte address 0x4 - core index']
  #allocation1 [shape = 'u32[144,128]{1,0:T(1,128)}', space=vmem, size = 0x12000, scoped, tag = 'internal scratch']
  %s0 = inlined_call_operand.hbm [shape: f32[384,10], index: 0, kind: input, shape index: {}]
  %s1 = inlined_call_operand.hbm [shape: f32[20,10], index: 1, kind: input, shape index: {}]
  %s2 = inlined_call_operand.hbm [shape: f32[20,1], index: 2, kind: input, shape index: {}]
  %s3 = inlined_call_operand.hbm [shape: f32[15,20], index: 3, kind: input, shape index: {}]
  %s4 = inlined_call_operand.hbm [shape: f32[15,1], index: 4, kind: input, shape index: {}]
  %s5 = inlined_call_operand.hbm [shape: f32[5,15], index: 5, kind: input, shape index: {}]
  %s6 = inlined_call_operand.hbm [shape: f32[5,1], index: 6, kind: input, shape index: {}]
  %s7 = inlined_call_operand.hbm [shape: f32[5,384], index: 7, kind: output, shape index: {}]
  %s8 = sld [smem:[#allocation0]]
  $region66: #{tpu_custom_call.1} parent=0
    _
  %s10 = ssub.s32 1, %s8
  %s11 = scalar_select 0, %s10, %s8
  $region1: #{tpu_custom_call.1} parent=0
    #allocation2 [shape = 'u8[196608]{0}', space=vmem, size = 0x30000, scoped, tag = 'input window, operand 0, single buffered']
    #allocation3 [shape = 's32[1]{0}', space=sflag, size = 0x4, scoped, tag = 'scoped memory for tpu_custom_call.1']
    #allocation4 [shape = 's32[1]{0}', space=sflag, size = 0x4, scoped, tag = 'scoped memory for tpu_custom_call.1']
    #allocation5 [shape = 'u8[12288]{0}', space=vmem, size = 0x3000, scoped, tag = 'input window, operand 1, single buffered']
    #allocation6 [shape = 's32[1]{0}', space=sflag, size = 0x4, scoped, tag = 'scoped memory for tpu_custom_call.1']
    #allocation7 [shape = 'u8[12288]{0}', space=vmem, size = 0x3000, scoped, tag = 'input window, operand 2, single buffered']
    #allocation8 [shape = 'u8[8192]{0}', space=vmem, size = 0x2000, scoped, tag = 'input window, operand 3, single buffered']
    #allocation9 [shape = 's32[1]{0}', space=sflag, size = 0x4, scoped, tag = 'scoped memory for tpu_custom_call.1']
    #allocation10 [shape = 'u8[8192]{0}', space=vmem, size = 0x2000, scoped, tag = 'input window, operand 4, single buffered']
    #allocation11 [shape = 'u8[4096]{0}', space=vmem, size = 0x1000, scoped, tag = 'input window, operand 5, single buffered']
    #allocation12 [shape = 's32[1]{0}', space=sflag, size = 0x4, scoped, tag = 'scoped memory for tpu_custom_call.1']
    #allocation13 [shape = 'u8[4096]{0}', space=vmem, size = 0x1000, scoped, tag = 'input window, operand 6, single buffered']
    #allocation14 [shape = 'u8[12288]{0}', space=vmem, size = 0x3000, scoped, tag = 'output window, operand 0, single buffered']
    %12 = vsyncpa [#allocation3], 0
    %13 = vsyncpa [#allocation6], 0
    %14 = vsyncpa [#allocation9], 0
    %15 = vsyncpa [#allocation12], 0
    %16 = vsyncpa [#allocation4], 0
    // Predicated region
    $region2: #{tpu_custom_call.1} parent=1 // pred_check
      _
    $region3: #{tpu_custom_call.1} parent=1 // pred_check_branch
      %18 = sbr.rel (0) target = $region5
    $region4: #{tpu_custom_call.1} parent=1 // pred_region
      %s20 = ssub.s32 6144, 6144
      %21 = vsyncadd [#allocation3], %s20
      %s22 = sshll.u32 [#allocation2], 4
      %s23 = int_to_ptr.vmem [resolvable:$true] %s22
      %28 = dma.hbm_to_vmem [thread:$0]  %s0, 6144, %s23, [#allocation3], 128, 128, 8
    $region5: #{tpu_custom_call.1} parent=1 // pred_fallthru
      _
    // Predicated region
    $region6: #{tpu_custom_call.1} parent=1 // pred_check
      _
    $region7: #{tpu_custom_call.1} parent=1 // pred_check_branch
      %30 = sbr.rel (0) target = $region9
    $region8: #{tpu_custom_call.1} parent=1 // pred_region
      %s32 = ssub.s32 384, 384
      %33 = vsyncadd [#allocation6], %s32
      %s34 = sshll.u32 [#allocation5], 4
      %s35 = int_to_ptr.vmem [resolvable:$true] %s34
      %40 = dma.hbm_to_vmem [thread:$0]  %s1, 384, %s35, [#allocation6], 128, 128, 8
    $region9: #{tpu_custom_call.1} parent=1 // pred_fallthru
      _
    // Predicated region
    $region10: #{tpu_custom_call.1} parent=1 // pred_check
      _
    $region11: #{tpu_custom_call.1} parent=1 // pred_check_branch
      %42 = sbr.rel (0) target = $region13
    $region12: #{tpu_custom_call.1} parent=1 // pred_region
      %s44 = ssub.s32 384, 384
      %45 = vsyncadd [#allocation6], %s44
      %s46 = sshll.u32 [#allocation7], 4
      %s47 = int_to_ptr.vmem [resolvable:$true] %s46
      %52 = dma.hbm_to_vmem [thread:$0]  %s2, 384, %s47, [#allocation6], 128, 128, 8
    $region13: #{tpu_custom_call.1} parent=1 // pred_fallthru
      _
    // Predicated region
    $region14: #{tpu_custom_call.1} parent=1 // pred_check
      _
    $region15: #{tpu_custom_call.1} parent=1 // pred_check_branch
      %54 = sbr.rel (0) target = $region17
    $region16: #{tpu_custom_call.1} parent=1 // pred_region
      %s56 = ssub.s32 256, 256
      %57 = vsyncadd [#allocation9], %s56
      %s58 = sshll.u32 [#allocation8], 4
      %s59 = int_to_ptr.vmem [resolvable:$true] %s58
      %64 = dma.hbm_to_vmem [thread:$0]  %s3, 256, %s59, [#allocation9], 128, 128, 8
    $region17: #{tpu_custom_call.1} parent=1 // pred_fallthru
      _
    // Predicated region
    $region18: #{tpu_custom_call.1} parent=1 // pred_check
      _
    $region19: #{tpu_custom_call.1} parent=1 // pred_check_branch
      %66 = sbr.rel (0) target = $region21
    $region20: #{tpu_custom_call.1} parent=1 // pred_region
      %s68 = ssub.s32 256, 256
      %69 = vsyncadd [#allocation9], %s68
      %s70 = sshll.u32 [#allocation10], 4
      %s71 = int_to_ptr.vmem [resolvable:$true] %s70
      %76 = dma.hbm_to_vmem [thread:$0]  %s4, 256, %s71, [#allocation9], 128, 128, 8
    $region21: #{tpu_custom_call.1} parent=1 // pred_fallthru
      _
    // Predicated region
    $region22: #{tpu_custom_call.1} parent=1 // pred_check
      _
    $region23: #{tpu_custom_call.1} parent=1 // pred_check_branch
      %78 = sbr.rel (0) target = $region25
    $region24: #{tpu_custom_call.1} parent=1 // pred_region
      %s80 = ssub.s32 128, 128
      %81 = vsyncadd [#allocation12], %s80
      %s83 = sshll.u32 [#allocation11], 4
      %s84 = int_to_ptr.vmem [resolvable:$true] %s83
      %86 = dma.hbm_to_vmem [thread:$0]  %s5, 128, %s84, [#allocation12]
    $region25: #{tpu_custom_call.1} parent=1 // pred_fallthru
      _
    // Predicated region
    $region26: #{tpu_custom_call.1} parent=1 // pred_check
      _
    $region27: #{tpu_custom_call.1} parent=1 // pred_check_branch
      %88 = sbr.rel (0) target = $region29
    $region28: #{tpu_custom_call.1} parent=1 // pred_region
      %s90 = ssub.s32 128, 128
      %91 = vsyncadd [#allocation12], %s90
      %s93 = sshll.u32 [#allocation13], 4
      %s94 = int_to_ptr.vmem [resolvable:$true] %s93
      %96 = dma.hbm_to_vmem [thread:$0]  %s6, 128, %s94, [#allocation12]
    $region29: #{tpu_custom_call.1} parent=1 // pred_fallthru
      _
    // Predicated region
    $region30: #{tpu_custom_call.1} parent=1 // pred_check
      _
    $region31: #{tpu_custom_call.1} parent=1 // pred_check_branch
      %98 = sbr.rel (0) target = $region33
    $region32: #{tpu_custom_call.1} parent=1 // pred_region
      %99 = dma.done [#allocation3], 6144
    $region33: #{tpu_custom_call.1} parent=1 // pred_fallthru
      _
    // Predicated region
    $region34: #{tpu_custom_call.1} parent=1 // pred_check
      _
    $region35: #{tpu_custom_call.1} parent=1 // pred_check_branch
      %101 = sbr.rel (0) target = $region37
    $region36: #{tpu_custom_call.1} parent=1 // pred_region
      %102 = dma.done [#allocation6], 384
    $region37: #{tpu_custom_call.1} parent=1 // pred_fallthru
      _
    // Predicated region
    $region38: #{tpu_custom_call.1} parent=1 // pred_check
      _
    $region39: #{tpu_custom_call.1} parent=1 // pred_check_branch
      %104 = sbr.rel (0) target = $region41
    $region40: #{tpu_custom_call.1} parent=1 // pred_region
      %105 = dma.done [#allocation6], 384
    $region41: #{tpu_custom_call.1} parent=1 // pred_fallthru
      _
    // Predicated region
    $region42: #{tpu_custom_call.1} parent=1 // pred_check
      _
    $region43: #{tpu_custom_call.1} parent=1 // pred_check_branch
      %107 = sbr.rel (0) target = $region45
    $region44: #{tpu_custom_call.1} parent=1 // pred_region
      %108 = dma.done [#allocation9], 256
    $region45: #{tpu_custom_call.1} parent=1 // pred_fallthru
      _
    // Predicated region
    $region46: #{tpu_custom_call.1} parent=1 // pred_check
      _
    $region47: #{tpu_custom_call.1} parent=1 // pred_check_branch
      %110 = sbr.rel (0) target = $region49
    $region48: #{tpu_custom_call.1} parent=1 // pred_region
      %111 = dma.done [#allocation9], 256
    $region49: #{tpu_custom_call.1} parent=1 // pred_fallthru
      _
    // Predicated region
    $region50: #{tpu_custom_call.1} parent=1 // pred_check
      _
    $region51: #{tpu_custom_call.1} parent=1 // pred_check_branch
      %113 = sbr.rel (0) target = $region53
    $region52: #{tpu_custom_call.1} parent=1 // pred_region
      %114 = dma.done [#allocation12], 128
    $region53: #{tpu_custom_call.1} parent=1 // pred_fallthru
      _
    // Predicated region
    $region54: #{tpu_custom_call.1} parent=1 // pred_check
      _
    $region55: #{tpu_custom_call.1} parent=1 // pred_check_branch
      %116 = sbr.rel (0) target = $region57
    $region56: #{tpu_custom_call.1} parent=1 // pred_region
      %117 = dma.done [#allocation12], 128
    $region57: #{tpu_custom_call.1} parent=1 // pred_fallthru
      _
    %v118 = vld [vmem:[#allocation2] sm:$0xff]
    %v119 = vld [vmem:[#allocation2 + $0x8] sm:$0xff]
    %v120 = vld [vmem:[#allocation2 + $0x10] sm:$0xff]
    %v121 = vld [vmem:[#allocation2 + $0x18] sm:$0xff]
    %v122 = vld [vmem:[#allocation2 + $0x20] sm:$0xff]
    %v123 = vld [vmem:[#allocation2 + $0x28] sm:$0xff]
    %v124 = vld [vmem:[#allocation2 + $0x30] sm:$0xff]
    %v125 = vld [vmem:[#allocation2 + $0x38] sm:$0xff]
    %v126 = vld [vmem:[#allocation2 + $0x40] sm:$0xff]
    %v127 = vld [vmem:[#allocation2 + $0x48] sm:$0xff]
    %v128 = vld [vmem:[#allocation2 + $0x50] sm:$0xff]
    %v129 = vld [vmem:[#allocation2 + $0x58] sm:$0xff]
    %v130 = vld [vmem:[#allocation2 + $0x60] sm:$0xff]
    %v131 = vld [vmem:[#allocation2 + $0x68] sm:$0xff]
    %v132 = vld [vmem:[#allocation2 + $0x70] sm:$0xff]
    %v133 = vld [vmem:[#allocation2 + $0x78] sm:$0xff]
    %v134 = vld [vmem:[#allocation2 + $0x80] sm:$0xff]
    %v135 = vld [vmem:[#allocation2 + $0x88] sm:$0xff]
    %v136 = vld [vmem:[#allocation2 + $0x90] sm:$0xff]
    %v137 = vld [vmem:[#allocation2 + $0x98] sm:$0xff]
    %v138 = vld [vmem:[#allocation2 + $0xa0] sm:$0xff]
    %v139 = vld [vmem:[#allocation2 + $0xa8] sm:$0xff]
    %v140 = vld [vmem:[#allocation2 + $0xb0] sm:$0xff]
    %v141 = vld [vmem:[#allocation2 + $0xb8] sm:$0xff]
    %v142 = vld [vmem:[#allocation2 + $0xc0] sm:$0xff]
    %v143 = vld [vmem:[#allocation2 + $0xc8] sm:$0xff]
    %v144 = vld [vmem:[#allocation2 + $0xd0] sm:$0xff]
    %v145 = vld [vmem:[#allocation2 + $0xd8] sm:$0xff]
    %v146 = vld [vmem:[#allocation2 + $0xe0] sm:$0xff]
    %v147 = vld [vmem:[#allocation2 + $0xe8] sm:$0xff]
    %v148 = vld [vmem:[#allocation2 + $0xf0] sm:$0xff]
    %v149 = vld [vmem:[#allocation2 + $0xf8] sm:$0xff]
    %v150 = vld [vmem:[#allocation2 + $0x100] sm:$0xff]
    %v151 = vld [vmem:[#allocation2 + $0x108] sm:$0xff]
    %v152 = vld [vmem:[#allocation2 + $0x110] sm:$0xff]
    %v153 = vld [vmem:[#allocation2 + $0x118] sm:$0xff]
    %v154 = vld [vmem:[#allocation2 + $0x120] sm:$0xff]
    %v155 = vld [vmem:[#allocation2 + $0x128] sm:$0xff]
    %v156 = vld [vmem:[#allocation2 + $0x130] sm:$0xff]
    %v157 = vld [vmem:[#allocation2 + $0x138] sm:$0xff]
    %v158 = vld [vmem:[#allocation2 + $0x140] sm:$0xff]
    %v159 = vld [vmem:[#allocation2 + $0x148] sm:$0xff]
    %v160 = vld [vmem:[#allocation2 + $0x150] sm:$0xff]
    %v161 = vld [vmem:[#allocation2 + $0x158] sm:$0xff]
    %v162 = vld [vmem:[#allocation2 + $0x160] sm:$0xff]
    %v163 = vld [vmem:[#allocation2 + $0x168] sm:$0xff]
    %v164 = vld [vmem:[#allocation2 + $0x170] sm:$0xff]
    %v165 = vld [vmem:[#allocation2 + $0x178] sm:$0xff]
    %v166 = vld [vmem:[#allocation5] sm:$0xff]
    %v167 = vld [vmem:[#allocation5 + $0x8] sm:$0xff]
    %v168 = vld [vmem:[#allocation5 + $0x10] sm:$0xf]
    %v169 = vld [vmem:[#allocation7] sm:$0xff]
    %v170 = vld [vmem:[#allocation7 + $0x8] sm:$0xff]
    %v171 = vld [vmem:[#allocation7 + $0x10] sm:$0xf]
    %173 = vset.pattern.permute.xlu0 0
    %174 = vperm.xlu0 %173, %v169
    %v175 = vpop.permute.xlu0 %174
    %178 = vset.pattern.permute.xlu0 0
    %179 = vperm.xlu0 %178, %v170
    %v180 = vpop.permute.xlu0 %179
    %183 = vset.pattern.permute.xlu0 0
    %184 = vperm.xlu0 %183, %v171
    %v185 = vpop.permute.xlu0 %184
    %vm187 = vcmask 80896
    %v189 = vsel %vm187, %v166, 0
    %v192 = vsel %vm187, %v167, 0
    %v195 = vsel %vm187, %v168, 0
    %v198 = vsel %vm187, %v118, 0
    %v201 = vsel %vm187, %v119, 0
    %v204 = vsel %vm187, %v120, 0
    %v207 = vsel %vm187, %v121, 0
    %v210 = vsel %vm187, %v122, 0
    %v213 = vsel %vm187, %v123, 0
    %v216 = vsel %vm187, %v124, 0
    %v219 = vsel %vm187, %v125, 0
    %v222 = vsel %vm187, %v126, 0
    %v225 = vsel %vm187, %v127, 0
    %v228 = vsel %vm187, %v128, 0
    %v231 = vsel %vm187, %v129, 0
    %v234 = vsel %vm187, %v130, 0
    %v237 = vsel %vm187, %v131, 0
    %v240 = vsel %vm187, %v132, 0
    %v243 = vsel %vm187, %v133, 0
    %v246 = vsel %vm187, %v134, 0
    %v249 = vsel %vm187, %v135, 0
    %v252 = vsel %vm187, %v136, 0
    %v255 = vsel %vm187, %v137, 0
    %v258 = vsel %vm187, %v138, 0
    %v261 = vsel %vm187, %v139, 0
    %v264 = vsel %vm187, %v140, 0
    %v267 = vsel %vm187, %v141, 0
    %v270 = vsel %vm187, %v142, 0
    %v273 = vsel %vm187, %v143, 0
    %v276 = vsel %vm187, %v144, 0
    %v279 = vsel %vm187, %v145, 0
    %v282 = vsel %vm187, %v146, 0
    %v285 = vsel %vm187, %v147, 0
    %v288 = vsel %vm187, %v148, 0
    %v291 = vsel %vm187, %v149, 0
    %v294 = vsel %vm187, %v150, 0
    %v297 = vsel %vm187, %v151, 0
    %v300 = vsel %vm187, %v152, 0
    %v303 = vsel %vm187, %v153, 0
    %v306 = vsel %vm187, %v154, 0
    %v309 = vsel %vm187, %v155, 0
    %v312 = vsel %vm187, %v156, 0
    %v315 = vsel %vm187, %v157, 0
    %v318 = vsel %vm187, %v158, 0
    %v321 = vsel %vm187, %v159, 0
    %v324 = vsel %vm187, %v160, 0
    %v327 = vsel %vm187, %v161, 0
    %v330 = vsel %vm187, %v162, 0
    %v333 = vsel %vm187, %v163, 0
    %v336 = vsel %vm187, %v164, 0
    %v339 = vsel %vm187, %v165, 0
    %341 = vmatprep.subr.mxu0 0.0
    %342 = vmatpush1.xpose.msra.mxu0 %v198
    %343 = vmatprep.subr.mxu0 0.0
    %344 = vmatpush1.xpose.msra.mxu0 %v201
    %345 = vmatprep.subr.mxu0 0.0
    %346 = vmatpush1.xpose.msra.mxu0 %v204
    %347 = vmatprep.subr.mxu0 0.0
    %348 = vmatpush1.xpose.msra.mxu0 %v207
    %349 = vmatprep.subr.mxu0 0.0
    %350 = vmatpush1.xpose.msra.mxu0 %v210
    %351 = vmatprep.subr.mxu0 0.0
    %352 = vmatpush1.xpose.msra.mxu0 %v213
    %353 = vmatprep.subr.mxu0 0.0
    %354 = vmatpush1.xpose.msra.mxu0 %v216
    %355 = vmatprep.subr.mxu0 0.0
    %356 = vmatpush1.xpose.msra.mxu0 %v219
    %357 = vmatprep.subr.mxu0 0.0
    %358 = vmatpush1.xpose.msra.mxu0 %v222
    %359 = vmatprep.subr.mxu0 0.0
    %360 = vmatpush1.xpose.msra.mxu0 %v225
    %361 = vmatprep.subr.mxu0 0.0
    %362 = vmatpush1.xpose.msra.mxu0 %v228
    %363 = vmatprep.subr.mxu0 0.0
    %364 = vmatpush1.xpose.msra.mxu0 %v231
    %365 = vmatprep.subr.mxu0 0.0
    %366 = vmatpush1.xpose.msra.mxu0 %v234
    %367 = vmatprep.subr.mxu0 0.0
    %368 = vmatpush1.xpose.msra.mxu0 %v237
    %369 = vmatprep.subr.mxu0 0.0
    %370 = vmatpush1.xpose.msra.mxu0 %v240
    %371 = vmatprep.subr.mxu0 0.0
    %372 = vmatpush1.xpose.msra.mxu0 %v243
    %373 = vmatprep.subr.mxu0 0.0
    %374 = vmatpush1.xpose.msra.mxu0 %v246
    %375 = vmatprep.subr.mxu0 0.0
    %376 = vmatpush1.xpose.msra.mxu0 %v249
    %377 = vmatprep.subr.mxu0 0.0
    %378 = vmatpush1.xpose.msra.mxu0 %v252
    %379 = vmatprep.subr.mxu0 0.0
    %380 = vmatpush1.xpose.msra.mxu0 %v255
    %381 = vmatprep.subr.mxu0 0.0
    %382 = vmatpush1.xpose.msra.mxu0 %v258
    %383 = vmatprep.subr.mxu0 0.0
    %384 = vmatpush1.xpose.msra.mxu0 %v261
    %385 = vmatprep.subr.mxu0 0.0
    %386 = vmatpush1.xpose.msra.mxu0 %v264
    %387 = vmatprep.subr.mxu0 0.0
    %388 = vmatpush1.xpose.msra.mxu0 %v267
    %389 = vmatprep.subr.mxu0 0.0
    %390 = vmatpush1.xpose.msra.mxu0 %v270
    %391 = vmatprep.subr.mxu0 0.0
    %392 = vmatpush1.xpose.msra.mxu0 %v273
    %393 = vmatprep.subr.mxu0 0.0
    %394 = vmatpush1.xpose.msra.mxu0 %v276
    %395 = vmatprep.subr.mxu0 0.0
    %396 = vmatpush1.xpose.msra.mxu0 %v279
    %397 = vmatprep.subr.mxu0 0.0
    %398 = vmatpush1.xpose.msra.mxu0 %v282
    %399 = vmatprep.subr.mxu0 0.0
    %400 = vmatpush1.xpose.msra.mxu0 %v285
    %401 = vmatprep.subr.mxu0 0.0
    %402 = vmatpush1.xpose.msra.mxu0 %v288
    %403 = vmatprep.subr.mxu0 0.0
    %404 = vmatpush1.xpose.msra.mxu0 %v291
    %405 = vmatprep.mubr.f32.mxu0 0.0
    %406 = vmatmul.mubr.f32.gmra.mrb[0].mxu0 %v189
    %v407 = vpop.f32.mrb[0].mxu0
    %v408 = vadd.f32 %v175, %v407
    %v409 = vpop.f32.mrb[0].mxu0
    %v410 = vadd.f32 %v175, %v409
    %411 = vmatprep.mubr.f32.mxu0 0.0
    %412 = vmatmul.mubr.f32.gmra.mrb[0].mxu0 %v192
    %v413 = vpop.f32.mrb[0].mxu0
    %v414 = vadd.f32 %v180, %v413
    %v415 = vpop.f32.mrb[0].mxu0
    %v416 = vadd.f32 %v180, %v415
    %417 = vmatprep.mubr.f32.mxu0 0.0
    %418 = vmatmul.mubr.f32.gmra.mrb[0].mxu0 %v195
    %v419 = vpop.f32.mrb[0].mxu0
    %v420 = vadd.f32 %v185, %v419
    %v421 = vpop.f32.mrb[0].mxu0
    %v422 = vadd.f32 %v185, %v421
    %423 = vdwg.mxu0
    %424 = vmatprep.subr.mxu0 0.0
    %425 = vmatpush1.xpose.msra.mxu0 %v294
    %426 = vmatprep.subr.mxu0 0.0
    %427 = vmatpush1.xpose.msra.mxu0 %v297
    %428 = vmatprep.subr.mxu0 0.0
    %429 = vmatpush1.xpose.msra.mxu0 %v300
    %430 = vmatprep.subr.mxu0 0.0
    %431 = vmatpush1.xpose.msra.mxu0 %v303
    %432 = vmatprep.subr.mxu0 0.0
    %433 = vmatpush1.xpose.msra.mxu0 %v306
    %434 = vmatprep.subr.mxu0 0.0
    %435 = vmatpush1.xpose.msra.mxu0 %v309
    %436 = vmatprep.subr.mxu0 0.0
    %437 = vmatpush1.xpose.msra.mxu0 %v312
    %438 = vmatprep.subr.mxu0 0.0
    %439 = vmatpush1.xpose.msra.mxu0 %v315
    %440 = vmatprep.subr.mxu0 0.0
    %441 = vmatpush1.xpose.msra.mxu0 %v318
    %442 = vmatprep.subr.mxu0 0.0
    %443 = vmatpush1.xpose.msra.mxu0 %v321
    %444 = vmatprep.subr.mxu0 0.0
    %445 = vmatpush1.xpose.msra.mxu0 %v324
    %446 = vmatprep.subr.mxu0 0.0
    %447 = vmatpush1.xpose.msra.mxu0 %v327
    %448 = vmatprep.subr.mxu0 0.0
    %449 = vmatpush1.xpose.msra.mxu0 %v330
    %450 = vmatprep.subr.mxu0 0.0
    %451 = vmatpush1.xpose.msra.mxu0 %v333
    %452 = vmatprep.subr.mxu0 0.0
    %453 = vmatpush1.xpose.msra.mxu0 %v336
    %454 = vmatprep.subr.mxu0 0.0
    %455 = vmatpush1.xpose.msra.mxu0 %v339
    %456 = vmatprep.subr.mxu0 0.0
    %457 = vmatpush1.xpose.msra.mxu0 0.0
    %458 = vmatprep.subr.mxu0 0.0
    %459 = vmatpush1.xpose.msra.mxu0 0.0
    %460 = vmatprep.subr.mxu0 0.0
    %461 = vmatpush1.xpose.msra.mxu0 0.0
    %462 = vmatprep.subr.mxu0 0.0
    %463 = vmatpush1.xpose.msra.mxu0 0.0
    %464 = vmatprep.subr.mxu0 0.0
    %465 = vmatpush1.xpose.msra.mxu0 0.0
    %466 = vmatprep.subr.mxu0 0.0
    %467 = vmatpush1.xpose.msra.mxu0 0.0
    %468 = vmatprep.subr.mxu0 0.0
    %469 = vmatpush1.xpose.msra.mxu0 0.0
    %470 = vmatprep.subr.mxu0 0.0
    %471 = vmatpush1.xpose.msra.mxu0 0.0
    %472 = vmatprep.subr.mxu0 0.0
    %473 = vmatpush1.xpose.msra.mxu0 0.0
    %474 = vmatprep.subr.mxu0 0.0
    %475 = vmatpush1.xpose.msra.mxu0 0.0
    %476 = vmatprep.subr.mxu0 0.0
    %477 = vmatpush1.xpose.msra.mxu0 0.0
    %478 = vmatprep.subr.mxu0 0.0
    %479 = vmatpush1.xpose.msra.mxu0 0.0
    %480 = vmatprep.subr.mxu0 0.0
    %481 = vmatpush1.xpose.msra.mxu0 0.0
    %482 = vmatprep.subr.mxu0 0.0
    %483 = vmatpush1.xpose.msra.mxu0 0.0
    %484 = vmatprep.subr.mxu0 0.0
    %485 = vmatpush1.xpose.msra.mxu0 0.0
    %486 = vmatprep.subr.mxu0 0.0
    %487 = vmatpush1.xpose.msra.mxu0 0.0
    %488 = vmatprep.mubr.f32.mxu0 0.0
    %489 = vmatmul.mubr.f32.gmra.mrb[0].mxu0 %v189
    %v490 = vpop.f32.mrb[0].mxu0
    %v491 = vadd.f32 %v175, %v490
    %v492 = vpop.f32.mrb[0].mxu0
    %493 = vmatprep.mubr.f32.mxu0 0.0
    %494 = vmatmul.mubr.f32.gmra.mrb[0].mxu0 %v192
    %v495 = vpop.f32.mrb[0].mxu0
    %v496 = vadd.f32 %v180, %v495
    %v497 = vpop.f32.mrb[0].mxu0
    %498 = vmatprep.mubr.f32.mxu0 0.0
    %499 = vmatmul.mubr.f32.gmra.mrb[0].mxu0 %v195
    %v500 = vpop.f32.mrb[0].mxu0
    %v501 = vadd.f32 %v185, %v500
    %v502 = vpop.f32.mrb[0].mxu0
    %503 = vdwg.mxu0
    %v504 = vmax.f32 %v408, 0.0
    %v505 = vmax.f32 %v410, 0.0
    %v506 = vmax.f32 %v491, 0.0
    %v507 = vmax.f32 %v414, 0.0
    %v508 = vmax.f32 %v416, 0.0
    %v509 = vmax.f32 %v496, 0.0
    %v510 = vmax.f32 %v420, 0.0
    %v511 = vmax.f32 %v422, 0.0
    %v512 = vmax.f32 %v501, 0.0
    %v513 = vld [vmem:[#allocation8] sm:$0xff]
    %v514 = vld [vmem:[#allocation8 + $0x8] sm:$0x7f]
    %v515 = vld [vmem:[#allocation10] sm:$0xff]
    %v516 = vld [vmem:[#allocation10 + $0x8] sm:$0x7f]
    %518 = vset.pattern.permute.xlu0 0
    %519 = vperm.xlu0 %518, %v515
    %v520 = vpop.permute.xlu0 %519
    %523 = vset.pattern.permute.xlu0 0
    %524 = vperm.xlu0 %523, %v516
    %v525 = vpop.permute.xlu0 %524
    %vm527 = vcmask 162816
    %v529 = vsel %vm527, %v513, 0
    %v532 = vsel %vm527, %v514, 0
    %vm534 = vcmask 1043456
    %v536 = vsel %vm534, %v510, 0
    %v539 = vsel %vm534, %v511, 0
    %v542 = vsel %vm534, %v512, 0
    %544 = vmatprep.subr.mxu0 %v505
    %545 = vmatpush1.msra.mxu0 %v504
    %546 = vmatprep.subr.mxu0 %v508
    %547 = vmatpush1.msra.mxu0 %v507
    %548 = vmatprep.subr.mxu0 %v539
    %549 = vmatpush1.msra.mxu0 %v536
    %550 = vmatprep.subr.mxu0 0.0
    %551 = vmatpush1.msra.mxu0 0.0
    %552 = vmatprep.subr.mxu0 0.0
    %553 = vmatpush1.msra.mxu0 0.0
    %554 = vmatprep.subr.mxu0 0.0
    %555 = vmatpush1.msra.mxu0 0.0
    %556 = vmatprep.subr.mxu0 0.0
    %557 = vmatpush1.msra.mxu0 0.0
    %558 = vmatprep.subr.mxu0 0.0
    %559 = vmatpush1.msra.mxu0 0.0
    %560 = vmatprep.subr.mxu0 0.0
    %561 = vmatpush1.msra.mxu0 0.0
    %562 = vmatprep.subr.mxu0 0.0
    %563 = vmatpush1.msra.mxu0 0.0
    %564 = vmatprep.subr.mxu0 0.0
    %565 = vmatpush1.msra.mxu0 0.0
    %566 = vmatprep.subr.mxu0 0.0
    %567 = vmatpush1.msra.mxu0 0.0
    %568 = vmatprep.subr.mxu0 0.0
    %569 = vmatpush1.msra.mxu0 0.0
    %570 = vmatprep.subr.mxu0 0.0
    %571 = vmatpush1.msra.mxu0 0.0
    %572 = vmatprep.subr.mxu0 0.0
    %573 = vmatpush1.msra.mxu0 0.0
    %574 = vmatprep.subr.mxu0 0.0
    %575 = vmatpush1.msra.mxu0 0.0
    %576 = vmatprep.subr.mxu0 0.0
    %577 = vmatpush1.msra.mxu0 0.0
    %578 = vmatprep.subr.mxu0 0.0
    %579 = vmatpush1.msra.mxu0 0.0
    %580 = vmatprep.subr.mxu0 0.0
    %581 = vmatpush1.msra.mxu0 0.0
    %582 = vmatprep.subr.mxu0 0.0
    %583 = vmatpush1.msra.mxu0 0.0
    %584 = vmatprep.subr.mxu0 0.0
    %585 = vmatpush1.msra.mxu0 0.0
    %586 = vmatprep.subr.mxu0 0.0
    %587 = vmatpush1.msra.mxu0 0.0
    %588 = vmatprep.subr.mxu0 0.0
    %589 = vmatpush1.msra.mxu0 0.0
    %590 = vmatprep.subr.mxu0 0.0
    %591 = vmatpush1.msra.mxu0 0.0
    %592 = vmatprep.subr.mxu0 0.0
    %593 = vmatpush1.msra.mxu0 0.0
    %594 = vmatprep.subr.mxu0 0.0
    %595 = vmatpush1.msra.mxu0 0.0
    %596 = vmatprep.subr.mxu0 0.0
    %597 = vmatpush1.msra.mxu0 0.0
    %598 = vmatprep.subr.mxu0 0.0
    %599 = vmatpush1.msra.mxu0 0.0
    %600 = vmatprep.subr.mxu0 0.0
    %601 = vmatpush1.msra.mxu0 0.0
    %602 = vmatprep.subr.mxu0 0.0
    %603 = vmatpush1.msra.mxu0 0.0
    %604 = vmatprep.subr.mxu0 0.0
    %605 = vmatpush1.msra.mxu0 0.0
    %606 = vmatprep.subr.mxu0 0.0
    %607 = vmatpush1.msra.mxu0 0.0
    %608 = vmatprep.mubr.f32.mxu0 0.0
    %609 = vmatmul.mubr.f32.gmra.mrb[0].mxu0 %v529
    %v610 = vpop.f32.mrb[0].mxu0
    %v611 = vadd.f32 %v520, %v610
    %v612 = vpop.f32.mrb[0].mxu0
    %v613 = vadd.f32 %v520, %v612
    %614 = vmatprep.mubr.f32.mxu0 0.0
    %615 = vmatmul.mubr.f32.gmra.mrb[0].mxu0 %v532
    %v616 = vpop.f32.mrb[0].mxu0
    %v617 = vadd.f32 %v525, %v616
    %v618 = vpop.f32.mrb[0].mxu0
    %v619 = vadd.f32 %v525, %v618
    %620 = vdwg.mxu0
    %621 = vmatprep.subr.mxu0 0.0
    %622 = vmatpush1.msra.mxu0 %v506
    %623 = vmatprep.subr.mxu0 0.0
    %624 = vmatpush1.msra.mxu0 %v509
    %625 = vmatprep.subr.mxu0 0.0
    %626 = vmatpush1.msra.mxu0 %v542
    %627 = vmatprep.subr.mxu0 0.0
    %628 = vmatpush1.msra.mxu0 0.0
    %629 = vmatprep.subr.mxu0 0.0
    %630 = vmatpush1.msra.mxu0 0.0
    %631 = vmatprep.subr.mxu0 0.0
    %632 = vmatpush1.msra.mxu0 0.0
    %633 = vmatprep.subr.mxu0 0.0
    %634 = vmatpush1.msra.mxu0 0.0
    %635 = vmatprep.subr.mxu0 0.0
    %636 = vmatpush1.msra.mxu0 0.0
    %637 = vmatprep.subr.mxu0 0.0
    %638 = vmatpush1.msra.mxu0 0.0
    %639 = vmatprep.subr.mxu0 0.0
    %640 = vmatpush1.msra.mxu0 0.0
    %641 = vmatprep.subr.mxu0 0.0
    %642 = vmatpush1.msra.mxu0 0.0
    %643 = vmatprep.subr.mxu0 0.0
    %644 = vmatpush1.msra.mxu0 0.0
    %645 = vmatprep.subr.mxu0 0.0
    %646 = vmatpush1.msra.mxu0 0.0
    %647 = vmatprep.subr.mxu0 0.0
    %648 = vmatpush1.msra.mxu0 0.0
    %649 = vmatprep.subr.mxu0 0.0
    %650 = vmatpush1.msra.mxu0 0.0
    %651 = vmatprep.subr.mxu0 0.0
    %652 = vmatpush1.msra.mxu0 0.0
    %653 = vmatprep.subr.mxu0 0.0
    %654 = vmatpush1.msra.mxu0 0.0
    %655 = vmatprep.subr.mxu0 0.0
    %656 = vmatpush1.msra.mxu0 0.0
    %657 = vmatprep.subr.mxu0 0.0
    %658 = vmatpush1.msra.mxu0 0.0
    %659 = vmatprep.subr.mxu0 0.0
    %660 = vmatpush1.msra.mxu0 0.0
    %661 = vmatprep.subr.mxu0 0.0
    %662 = vmatpush1.msra.mxu0 0.0
    %663 = vmatprep.subr.mxu0 0.0
    %664 = vmatpush1.msra.mxu0 0.0
    %665 = vmatprep.subr.mxu0 0.0
    %666 = vmatpush1.msra.mxu0 0.0
    %667 = vmatprep.subr.mxu0 0.0
    %668 = vmatpush1.msra.mxu0 0.0
    %669 = vmatprep.subr.mxu0 0.0
    %670 = vmatpush1.msra.mxu0 0.0
    %671 = vmatprep.subr.mxu0 0.0
    %672 = vmatpush1.msra.mxu0 0.0
    %673 = vmatprep.subr.mxu0 0.0
    %674 = vmatpush1.msra.mxu0 0.0
    %675 = vmatprep.subr.mxu0 0.0
    %676 = vmatpush1.msra.mxu0 0.0
    %677 = vmatprep.subr.mxu0 0.0
    %678 = vmatpush1.msra.mxu0 0.0
    %679 = vmatprep.subr.mxu0 0.0
    %680 = vmatpush1.msra.mxu0 0.0
    %681 = vmatprep.subr.mxu0 0.0
    %682 = vmatpush1.msra.mxu0 0.0
    %683 = vmatprep.subr.mxu0 0.0
    %684 = vmatpush1.msra.mxu0 0.0
    %685 = vmatprep.mubr.f32.mxu0 0.0
    %686 = vmatmul.mubr.f32.gmra.mrb[0].mxu0 %v529
    %v687 = vpop.f32.mrb[0].mxu0
    %v688 = vadd.f32 %v520, %v687
    %v689 = vpop.f32.mrb[0].mxu0
    %690 = vmatprep.mubr.f32.mxu0 0.0
    %691 = vmatmul.mubr.f32.gmra.mrb[0].mxu0 %v532
    %v692 = vpop.f32.mrb[0].mxu0
    %v693 = vadd.f32 %v525, %v692
    %v694 = vpop.f32.mrb[0].mxu0
    %695 = vdwg.mxu0
    %v696 = vmax.f32 %v611, 0.0
    %v697 = vmax.f32 %v613, 0.0
    %v698 = vmax.f32 %v688, 0.0
    %v699 = vmax.f32 %v617, 0.0
    %v700 = vmax.f32 %v619, 0.0
    %v701 = vmax.f32 %v693, 0.0
    %v702 = vld [vmem:[#allocation11] sm:$0x1f]
    %v703 = vld [vmem:[#allocation13] sm:$0x1f]
    %705 = vset.pattern.permute.xlu0 0
    %706 = vperm.xlu0 %705, %v703
    %v707 = vpop.permute.xlu0 %706
    %vm709 = vcmask 121856
    %v711 = vsel %vm709, %v702, 0
    %vm713 = vcmask 1046528
    %v715 = vsel %vm713, %v699, 0
    %v718 = vsel %vm713, %v700, 0
    %v721 = vsel %vm713, %v701, 0
    %723 = vmatprep.subr.mxu0 %v697
    %724 = vmatpush1.msra.mxu0 %v696
    %725 = vmatprep.subr.mxu0 %v718
    %726 = vmatpush1.msra.mxu0 %v715
    %727 = vmatprep.subr.mxu0 0.0
    %728 = vmatpush1.msra.mxu0 0.0
    %729 = vmatprep.subr.mxu0 0.0
    %730 = vmatpush1.msra.mxu0 0.0
    %731 = vmatprep.subr.mxu0 0.0
    %732 = vmatpush1.msra.mxu0 0.0
    %733 = vmatprep.subr.mxu0 0.0
    %734 = vmatpush1.msra.mxu0 0.0
    %735 = vmatprep.subr.mxu0 0.0
    %736 = vmatpush1.msra.mxu0 0.0
    %737 = vmatprep.subr.mxu0 0.0
    %738 = vmatpush1.msra.mxu0 0.0
    %739 = vmatprep.subr.mxu0 0.0
    %740 = vmatpush1.msra.mxu0 0.0
    %741 = vmatprep.subr.mxu0 0.0
    %742 = vmatpush1.msra.mxu0 0.0
    %743 = vmatprep.subr.mxu0 0.0
    %744 = vmatpush1.msra.mxu0 0.0
    %745 = vmatprep.subr.mxu0 0.0
    %746 = vmatpush1.msra.mxu0 0.0
    %747 = vmatprep.subr.mxu0 0.0
    %748 = vmatpush1.msra.mxu0 0.0
    %749 = vmatprep.subr.mxu0 0.0
    %750 = vmatpush1.msra.mxu0 0.0
    %751 = vmatprep.subr.mxu0 0.0
    %752 = vmatpush1.msra.mxu0 0.0
    %753 = vmatprep.subr.mxu0 0.0
    %754 = vmatpush1.msra.mxu0 0.0
    %755 = vmatprep.subr.mxu0 0.0
    %756 = vmatpush1.msra.mxu0 0.0
    %757 = vmatprep.subr.mxu0 0.0
    %758 = vmatpush1.msra.mxu0 0.0
    %759 = vmatprep.subr.mxu0 0.0
    %760 = vmatpush1.msra.mxu0 0.0
    %761 = vmatprep.subr.mxu0 0.0
    %762 = vmatpush1.msra.mxu0 0.0
    %763 = vmatprep.subr.mxu0 0.0
    %764 = vmatpush1.msra.mxu0 0.0
    %765 = vmatprep.subr.mxu0 0.0
    %766 = vmatpush1.msra.mxu0 0.0
    %767 = vmatprep.subr.mxu0 0.0
    %768 = vmatpush1.msra.mxu0 0.0
    %769 = vmatprep.subr.mxu0 0.0
    %770 = vmatpush1.msra.mxu0 0.0
    %771 = vmatprep.subr.mxu0 0.0
    %772 = vmatpush1.msra.mxu0 0.0
    %773 = vmatprep.subr.mxu0 0.0
    %774 = vmatpush1.msra.mxu0 0.0
    %775 = vmatprep.subr.mxu0 0.0
    %776 = vmatpush1.msra.mxu0 0.0
    %777 = vmatprep.subr.mxu0 0.0
    %778 = vmatpush1.msra.mxu0 0.0
    %779 = vmatprep.subr.mxu0 0.0
    %780 = vmatpush1.msra.mxu0 0.0
    %781 = vmatprep.subr.mxu0 0.0
    %782 = vmatpush1.msra.mxu0 0.0
    %783 = vmatprep.subr.mxu0 0.0
    %784 = vmatpush1.msra.mxu0 0.0
    %785 = vmatprep.subr.mxu0 0.0
    %786 = vmatpush1.msra.mxu0 0.0
    %787 = vmatprep.mubr.f32.mxu0 0.0
    %788 = vmatmul.mubr.f32.gmra.mrb[0].mxu0 %v711
    %v789 = vpop.f32.mrb[0].mxu0
    %v790 = vadd.f32 %v707, %v789
    %v791 = vpop.f32.mrb[0].mxu0
    %v792 = vadd.f32 %v707, %v791
    %793 = vdwg.mxu0
    %794 = vmatprep.subr.mxu0 0.0
    %795 = vmatpush1.msra.mxu0 %v698
    %796 = vmatprep.subr.mxu0 0.0
    %797 = vmatpush1.msra.mxu0 %v721
    %798 = vmatprep.subr.mxu0 0.0
    %799 = vmatpush1.msra.mxu0 0.0
    %800 = vmatprep.subr.mxu0 0.0
    %801 = vmatpush1.msra.mxu0 0.0
    %802 = vmatprep.subr.mxu0 0.0
    %803 = vmatpush1.msra.mxu0 0.0
    %804 = vmatprep.subr.mxu0 0.0
    %805 = vmatpush1.msra.mxu0 0.0
    %806 = vmatprep.subr.mxu0 0.0
    %807 = vmatpush1.msra.mxu0 0.0
    %808 = vmatprep.subr.mxu0 0.0
    %809 = vmatpush1.msra.mxu0 0.0
    %810 = vmatprep.subr.mxu0 0.0
    %811 = vmatpush1.msra.mxu0 0.0
    %812 = vmatprep.subr.mxu0 0.0
    %813 = vmatpush1.msra.mxu0 0.0
    %814 = vmatprep.subr.mxu0 0.0
    %815 = vmatpush1.msra.mxu0 0.0
    %816 = vmatprep.subr.mxu0 0.0
    %817 = vmatpush1.msra.mxu0 0.0
    %818 = vmatprep.subr.mxu0 0.0
    %819 = vmatpush1.msra.mxu0 0.0
    %820 = vmatprep.subr.mxu0 0.0
    %821 = vmatpush1.msra.mxu0 0.0
    %822 = vmatprep.subr.mxu0 0.0
    %823 = vmatpush1.msra.mxu0 0.0
    %824 = vmatprep.subr.mxu0 0.0
    %825 = vmatpush1.msra.mxu0 0.0
    %826 = vmatprep.subr.mxu0 0.0
    %827 = vmatpush1.msra.mxu0 0.0
    %828 = vmatprep.subr.mxu0 0.0
    %829 = vmatpush1.msra.mxu0 0.0
    %830 = vmatprep.subr.mxu0 0.0
    %831 = vmatpush1.msra.mxu0 0.0
    %832 = vmatprep.subr.mxu0 0.0
    %833 = vmatpush1.msra.mxu0 0.0
    %834 = vmatprep.subr.mxu0 0.0
    %835 = vmatpush1.msra.mxu0 0.0
    %836 = vmatprep.subr.mxu0 0.0
    %837 = vmatpush1.msra.mxu0 0.0
    %838 = vmatprep.subr.mxu0 0.0
    %839 = vmatpush1.msra.mxu0 0.0
    %840 = vmatprep.subr.mxu0 0.0
    %841 = vmatpush1.msra.mxu0 0.0
    %842 = vmatprep.subr.mxu0 0.0
    %843 = vmatpush1.msra.mxu0 0.0
    %844 = vmatprep.subr.mxu0 0.0
    %845 = vmatpush1.msra.mxu0 0.0
    %846 = vmatprep.subr.mxu0 0.0
    %847 = vmatpush1.msra.mxu0 0.0
    %848 = vmatprep.subr.mxu0 0.0
    %849 = vmatpush1.msra.mxu0 0.0
    %850 = vmatprep.subr.mxu0 0.0
    %851 = vmatpush1.msra.mxu0 0.0
    %852 = vmatprep.subr.mxu0 0.0
    %853 = vmatpush1.msra.mxu0 0.0
    %854 = vmatprep.subr.mxu0 0.0
    %855 = vmatpush1.msra.mxu0 0.0
    %856 = vmatprep.subr.mxu0 0.0
    %857 = vmatpush1.msra.mxu0 0.0
    %858 = vmatprep.mubr.f32.mxu0 0.0
    %859 = vmatmul.mubr.f32.gmra.mrb[0].mxu0 %v711
    %v860 = vpop.f32.mrb[0].mxu0
    %v861 = vadd.f32 %v707, %v860
    %v862 = vpop.f32.mrb[0].mxu0
    %863 = vdwg.mxu0
    %v864 = vsub.f32 0.0, %v790
    %v865 = vsub.f32 0.0, %v792
    %v866 = vsub.f32 0.0, %v861
    %v867 = vmul.f32 %v864, 1.442695
    %v868 = vpow.pop %v867
    %v869 = vmul.f32 %v865, 1.442695
    %v870 = vpow.pop %v869
    %v871 = vmul.f32 %v866, 1.442695
    %v872 = vpow.pop %v871
    %v873 = vadd.f32 %v868, 1.0
    %v874 = vadd.f32 %v870, 1.0
    %v875 = vadd.f32 %v872, 1.0
    %v876 = vrcp.pop %v873
    %v877 = vmul.f32 1.0, %v876
    %v878 = vrcp.pop %v874
    %v879 = vmul.f32 1.0, %v878
    %v880 = vrcp.pop %v875
    %v881 = vmul.f32 1.0, %v880
    %882 = vst [vmem:[#allocation14] sm:$0x1f] %v877
    %883 = vst [vmem:[#allocation14 + $0x8] sm:$0x1f] %v879
    %884 = vst [vmem:[#allocation14 + $0x10] sm:$0x1f] %v881
    // Predicated region
    $region58: #{tpu_custom_call.1} parent=1 // pred_check
      _
    $region59: #{tpu_custom_call.1} parent=1 // pred_check_branch
      %886 = sbr.rel (0) target = $region61
    $region60: #{tpu_custom_call.1} parent=1 // pred_region
      %s888 = ssub.s32 384, 384
      %889 = vsyncadd [#allocation4], %s888
      %s891 = sshll.u32 [#allocation14], 4
      %s892 = int_to_ptr.vmem [resolvable:$true] %s891
      %894 = dma.vmem_to_hbm [thread:$0]  %s892, 384, %s7, [#allocation4]
    $region61: #{tpu_custom_call.1} parent=1 // pred_fallthru
      _
    // Predicated region
    $region62: #{tpu_custom_call.1} parent=1 // pred_check
      _
    $region63: #{tpu_custom_call.1} parent=1 // pred_check_branch
      %896 = sbr.rel (0) target = $region65
    $region64: #{tpu_custom_call.1} parent=1 // pred_region
      %897 = dma.done [#allocation4], 384
    $region65: #{tpu_custom_call.1} parent=1 // pred_fallthru
      _
    %898 = vsyncpa [#allocation3], 1
    %899 = vsyncpa [#allocation6], 1
    %900 = vsyncpa [#allocation9], 1
    %901 = vsyncpa [#allocation12], 1
    %902 = vsyncpa [#allocation4], 1

</llo_original>
